<compile_context>
chip_gen: v7x
topology: tpu7x:2x2x1
jax: 0.10.0
libtpu: 0.0.40
codegen_flags: <defaults>
</compile_context>

<pallas_src>
import functools
import math

import jax
import jax.numpy as jnp
import numpy as np
from jax import lax
from jax.experimental import pallas as pl
from jax.experimental.pallas import tpu as pltpu


def _lowbias32(h):
    """Bijective 32-bit integer mixer (Wellons' lowbias32). Pure VPU int ops."""
    h = h ^ (h >> jnp.uint32(16))
    h = h * jnp.uint32(0x7FEB352D)
    h = h ^ (h >> jnp.uint32(15))
    h = h * jnp.uint32(0x846CA68B)
    h = h ^ (h >> jnp.uint32(16))
    return h


def _pe_add_dropout_kernel(seed_ref, x_ref, pe_ref, o_ref, *, p, training):
    # x_ref: (tS, B, D); pe_ref: (tS, 1, D); seed_ref: SMEM scalar (prefetched).
    if training and p >= 1.0:
        # torch nn.Dropout(p=1.0) zeroes everything.
        o_ref[...] = jnp.zeros_like(o_ref)
        return

    y = x_ref[...] + pe_ref[...]            # broadcast over batch, in x.dtype

    if training and p > 0.0:
        tS, B, D = y.shape
        # Globally-unique per-element counter -> masks are independent across
        # grid tiles and invariant to the tiling choice.
        s_idx = lax.broadcasted_iota(jnp.int32, y.shape, 0).astype(jnp.uint32)
        b_idx = lax.broadcasted_iota(jnp.int32, y.shape, 1).astype(jnp.uint32)
        d_idx = lax.broadcasted_iota(jnp.int32, y.shape, 2).astype(jnp.uint32)
        row_off = (pl.program_id(0) * tS).astype(jnp.uint32)
        ctr = (s_idx + row_off) * jnp.uint32(B * D) + b_idx * jnp.uint32(D) + d_idx

        seed_u = seed_ref[0].astype(jnp.uint32)
        key = seed_u * jnp.uint32(0x9E3779B1) + jnp.uint32(0x85EBCA77)
        bits = _lowbias32(ctr ^ key)

        # Integer-domain keep test: P(bits < thr) ~= p  =>  keep with prob 1-p.
        thr = jnp.uint32(min(int(round(p * 4294967296.0)), 0xFFFFFFFF))
        keep = bits >= thr
        scale = 1.0 / (1.0 - p)
        y = jnp.where(keep, y * scale, jnp.zeros_like(y))
        # TODO(synk): dropout statistics match torch (keep prob 1-p, 1/(1-p)
        # scaling) but the exact random stream differs from torch's RNG.

    o_ref[...] = y.astype(o_ref.dtype)


def make_positional_encoding_table(d_model, max_len=5000, dtype=jnp.float32):
    """Replicates the PyTorch buffer (stored here as (max_len, d_model))."""
    position = np.arange(0, max_len, dtype=np.float32)[:, None]            # (L, 1)
    div_term = np.exp(np.arange(0, d_model, 2, dtype=np.float32)
                      * (-math.log(10000.0) / d_model))                     # (D/2,)
    pe = np.zeros((max_len, d_model), dtype=np.float32)
    pe[:, 0::2] = np.sin(position * div_term)
    pe[:, 1::2] = np.cos(position * div_term)
    return jnp.asarray(pe, dtype=dtype)


def positional_encoding_forward(x, pe_table, *, p=0.1, training=True, seed=0,
                                block_rows=None):
    """x: (S, B, D) float array. Returns dropout(x + pe[:S])."""
    S, B, D = x.shape
    pe = pe_table[:S].astype(x.dtype)[:, None, :]        # (S, 1, D), cast once

    itemsize = jnp.dtype(x.dtype).itemsize
    row_bytes = B * D * itemsize
    if block_rows is None:
        # ~1 MiB x-tile; with input+output double buffering that is ~4 MiB of
        # VMEM for the big operands -- safe on v7x (64 MiB physical / 32 MiB
        # default scoped) while amortizing the ~0.35us per-grid-step overhead.
        block_rows = max(1, (1 << 20) // max(1, row_bytes))
    tS = int(min(S, block_rows))
    if tS < S and tS >= 8:
        tS = (tS // 8) * 8                                # keep tiles 8-aligned
    grid = (pl.cdiv(S, tS),)

    kernel = functools.partial(_pe_add_dropout_kernel,
                               p=float(p), training=bool(training))
    seed_arr = jnp.asarray([seed], dtype=jnp.int32)

    cost = pl.CostEstimate(
        flops=2 * x.size,
        transcendentals=0,
        bytes_accessed=2 * x.size * itemsize + pe.size * itemsize,
    )

    return pl.pallas_call(
        kernel,
        out_shape=jax.ShapeDtypeStruct(x.shape, x.dtype),
        grid_spec=pltpu.PrefetchScalarGridSpec(
            num_scalar_prefetch=1,                        # seed -> SMEM
            grid=grid,
            in_specs=[
                pl.BlockSpec((tS, B, D), lambda i, sref: (i, 0, 0)),
                pl.BlockSpec((tS, 1, D), lambda i, sref: (i, 0, 0)),
            ],
            out_specs=pl.BlockSpec((tS, B, D), lambda i, sref: (i, 0, 0)),
        ),
        compiler_params=pltpu.CompilerParams(
            # independent tiles -> shard the grid across TensorCores (v7x)
            dimension_semantics=("parallel",),
            vmem_limit_bytes=32 * 1024 * 1024,
        ),
        cost_estimate=cost,
    )(seed_arr, x, pe)


if __name__ == "__main__":
    d_model = 128            # multiple of 128 -> lane-dense blocks
    max_len = 64
    seq_len, batch = 16, 4
    p = 0.1

    key = jax.random.PRNGKey(0)
    x = jax.random.normal(key, (seq_len, batch, d_model), dtype=jnp.float32)
    pe_table = make_positional_encoding_table(d_model, max_len=max_len)

    ref = np.asarray(x) + np.asarray(pe_table)[:seq_len][:, None, :]

    # Eval mode (dropout inactive): exact semantics vs. reference.
    y_eval = positional_encoding_forward(x, pe_table, p=p, training=False,
                                         block_rows=8)
    y_eval = jax.block_until_ready(y_eval)
    assert np.allclose(np.asarray(y_eval), ref, atol=1e-5, rtol=1e-5), "eval mismatch"

    # Train mode (dropout active, deterministic counter-hash PRNG), grid of 2 tiles.
    y_train = positional_encoding_forward(x, pe_table, p=p, training=True,
                                          seed=1234, block_rows=8)
    y_train = jax.block_until_ready(y_train)
    y_train_np = np.asarray(y_train)
    assert y_train_np.shape == x.shape and y_train_np.dtype == np.float32

    dropped = (y_train_np == 0.0)
    drop_frac = float(dropped.mean())
    assert 0.02 <= drop_frac <= 0.30, f"unexpected drop fraction {drop_frac}"
    kept = ~dropped
    scale = 1.0 / (1.0 - p)
    assert np.allclose(y_train_np[kept], ref[kept] * scale, atol=1e-4, rtol=1e-4), \
        "kept elements do not match scaled (x + pe)"

    print("KERNEL_OK")
</pallas_src>

<mosaic_0001>
module attributes {stable_mosaic.version = 11 : i64} {
  func.func @_pe_add_dropout_kernel(%arg0: i32, %arg1: memref<1xi32, #tpu.memory_space<smem>>, %arg2: memref<8x4x128xf32, #tpu.memory_space<vmem>>, %arg3: memref<8x1x128xf32, #tpu.memory_space<vmem>>, %arg4: memref<8x4x128xf32, #tpu.memory_space<vmem>>) attributes {dimension_semantics = [#tpu.dimension_semantics<parallel>], iteration_bounds = array<i64: 2>, scalar_prefetch = 1 : i64, scratch_operands = 0 : i64, tpu.core_type = #tpu.core_type<tc>, window_params = [{transform_indices = @transform_0, window_bounds = array<i64: 8, 4, 128>}, {transform_indices = @transform_1, window_bounds = array<i64: 8, 1, 128>}, {transform_indices = @transform_2, window_bounds = array<i64: 8, 4, 128>}]} {
    %c0 = arith.constant 0 : index
    %c0_0 = arith.constant 0 : index
    %c0_1 = arith.constant 0 : index
    %0 = vector.load %arg2[%c0, %c0_0, %c0_1] : memref<8x4x128xf32, #tpu.memory_space<vmem>>, vector<8x4x128xf32>
    %c0_2 = arith.constant 0 : index
    %c0_3 = arith.constant 0 : index
    %c0_4 = arith.constant 0 : index
    %1 = vector.load %arg3[%c0_2, %c0_3, %c0_4] : memref<8x1x128xf32, #tpu.memory_space<vmem>>, vector<8x1x128xf32>
    %2 = vector.broadcast %1 : vector<8x1x128xf32> to vector<8x4x128xf32>
    %3 = arith.addf %0, %2 : vector<8x4x128xf32>
    %c0_5 = arith.constant 0 : index
    %c0_6 = arith.constant 0 : index
    %c0_7 = arith.constant 0 : index
    %4 = vector.load %arg4[%c0_5, %c0_6, %c0_7] : memref<8x4x128xf32, #tpu.memory_space<vmem>>, vector<8x4x128xf32>
    tpu.vector_store %arg4[%c0_5, %c0_6, %c0_7], %3 {strides = array<i32>} : memref<8x4x128xf32, #tpu.memory_space<vmem>>, vector<8x4x128xf32>,
    return
  }
  func.func @transform_0(%arg0: i32, %arg1: memref<1xi32, #tpu.memory_space<smem>>) -> (i32, i32, i32) {
    %c0_i32 = arith.constant 0 : i32
    %c0_i32_0 = arith.constant 0 : i32
    %c0_i32_1 = arith.constant 0 : i32
    return %arg0, %c0_i32, %c0_i32_0 : i32, i32, i32
  }
  func.func @transform_1(%arg0: i32, %arg1: memref<1xi32, #tpu.memory_space<smem>>) -> (i32, i32, i32) {
    %c0_i32 = arith.constant 0 : i32
    %c0_i32_0 = arith.constant 0 : i32
    %c0_i32_1 = arith.constant 0 : i32
    return %arg0, %c0_i32, %c0_i32_0 : i32, i32, i32
  }
  func.func @transform_2(%arg0: i32, %arg1: memref<1xi32, #tpu.memory_space<smem>>) -> (i32, i32, i32) {
    %c0_i32 = arith.constant 0 : i32
    %c0_i32_0 = arith.constant 0 : i32
    %c0_i32_1 = arith.constant 0 : i32
    return %arg0, %c0_i32, %c0_i32_0 : i32, i32, i32
  }
}

</mosaic_0001>

<llo_original>
// kernel: tpu_custom_call.1
$region0: #{tpu_custom_call.1}
  #allocation0 [shape = 'u32[]', space=smem, size = 0x4, offset = 0x4, fixed_abs, tag = 'smem constant byte address 0x4 - core index']
  #allocation1 [shape = 'u32[144,128]{1,0:T(1,128)}', space=vmem, size = 0x12000, scoped, tag = 'internal scratch']
  #allocation2 [shape = 's32[1]{0}', space=sflag, size = 0x4, scoped, tag = 'scoped memory for tpu_custom_call.1']
  #allocation3 [shape = 's32[1]{0:T(128)S(6)}', space=smem, size = 0x200, scoped, tag = 'prefetched SMEM operand 0']
  %s0 = inlined_call_operand.<no memory space> [shape: s32[1], index: 0, kind: input, shape index: {}]
  %s1 = inlined_call_operand.hbm [shape: f32[16,4,128], index: 1, kind: input, shape index: {}]
  %s2 = inlined_call_operand.hbm [shape: f32[16,1,128], index: 2, kind: input, shape index: {}]
  %s3 = inlined_call_operand.hbm [shape: f32[16,4,128], index: 3, kind: output, shape index: {}]
  %s4 = sld [smem:[#allocation0]]
  $region49: #{tpu_custom_call.1} parent=0
    _
  %s6 = ssub.s32 1, %s4
  %s7 = scalar_select 0, %s6, %s4
  %8 = sst [smem:[#allocation3]] %s0
  $region1: #{tpu_custom_call.1} parent=0
    #allocation4 [shape = 'u8[32768]{0}', space=vmem, size = 0x8000, scoped, tag = 'input window, operand 1']
    #allocation5 [shape = 's32[2]{0}', space=sflag, size = 0x8, scoped, tag = 'scoped memory for tpu_custom_call.1']
    #allocation6 [shape = 's32[2]{0}', space=sflag, size = 0x8, scoped, tag = 'scoped memory for tpu_custom_call.1']
    #allocation7 [shape = 'u8[8192]{0}', space=vmem, size = 0x2000, scoped, tag = 'input window, operand 2']
    #allocation8 [shape = 's32[2]{0}', space=sflag, size = 0x8, scoped, tag = 'scoped memory for tpu_custom_call.1']
    #allocation9 [shape = 'u8[32768]{0}', space=vmem, size = 0x8000, scoped, tag = 'output window, operand 0']
    %9 = vsyncpa [#allocation5], 0
    %s10 = scalar_lea.sflag [#allocation5], 1
    %11 = vsyncpa %s10, 0
    %12 = vsyncpa [#allocation8], 0
    %s13 = scalar_lea.sflag [#allocation8], 1
    %14 = vsyncpa %s13, 0
    %15 = vsyncpa [#allocation6], 0
    %s16 = scalar_lea.sflag [#allocation6], 1
    %17 = vsyncpa %s16, 0
    loop: start=0, step=1, limit=4
    $region2: #{tpu_custom_call.1} parent=1 // loop_pre_header
      _
    $region3: #{tpu_custom_call.1} parent=1 // loop_header
      %s19 = sphi 0, %s23
      %p20 = scmp.ge.s32.totalorder %s19, 4
      %s29 = sphi 0, %s31
      %s32 = sphi 0, %s29
      %s33 = sphi 0, %s32
      %s49 = sphi 0, %s33
      %s55 = sphi 0, %s57
      %s58 = sphi 0, %s55
      %s59 = sphi 0, %s58
      %s75 = sphi 0, %s59
      %s81 = sphi 0, %s83
      %s84 = sphi 0, %s81
      %s85 = sphi 0, %s84
      %s101 = sphi 0, %s85
    $region4: #{tpu_custom_call.1} parent=1 // loop_header_branch
      %22 = sbr.rel (%p20) target = $region8
    $region5: #{tpu_custom_call.1} parent=1 // loop_body
      %s24 = ssub.s32 %s19, 1
      %s25 = ssub.s32 %s19, 2
      %s26 = sadd.s32 %s19, 1
      %s27 = ssub.s32 %s19, %s26
      %p28 = scmp.eq.s32.totalorder %s27, 0
      %s30 = sadd.s32 %s29, 1
      %s31 = scalar_select %p28, %s29, %s30
      %p34 = pneg %p28
      %p35 = scmp.eq.s32.totalorder %s19, 1
      %p36 = por %p34, %p35
      %p37 = scmp.ne.s32.totalorder %s29, %s32
      %p38 = scmp.eq.s32.totalorder %s19, 0
      %p39 = por %p37, %p38
      %p40 = scmp.ne.s32.totalorder %s29, %s32
      %p41 = scmp.eq.s32.totalorder %s24, 1
      %p42 = por %p40, %p41
      %p43 = scmp.ne.s32.totalorder %s32, %s33
      %p44 = scmp.eq.s32.totalorder %s24, 0
      %p45 = por %p43, %p44
      %p46 = scmp.ne.s32.totalorder %s32, %s33
      %p47 = scmp.eq.s32.totalorder %s25, 1
      %p48 = por %p46, %p47
      %p50 = scmp.ne.s32.totalorder %s33, %s49
      %p51 = scmp.eq.s32.totalorder %s25, 0
      %p52 = por %p50, %p51
      %s53 = ssub.s32 %s19, %s26
      %p54 = scmp.eq.s32.totalorder %s53, 0
      %s56 = sadd.s32 %s55, 1
      %s57 = scalar_select %p54, %s55, %s56
      %p60 = pneg %p54
      %p61 = scmp.eq.s32.totalorder %s19, 1
      %p62 = por %p60, %p61
      %p63 = scmp.ne.s32.totalorder %s55, %s58
      %p64 = scmp.eq.s32.totalorder %s19, 0
      %p65 = por %p63, %p64
      %p66 = scmp.ne.s32.totalorder %s55, %s58
      %p67 = scmp.eq.s32.totalorder %s24, 1
      %p68 = por %p66, %p67
      %p69 = scmp.ne.s32.totalorder %s58, %s59
      %p70 = scmp.eq.s32.totalorder %s24, 0
      %p71 = por %p69, %p70
      %p72 = scmp.ne.s32.totalorder %s58, %s59
      %p73 = scmp.eq.s32.totalorder %s25, 1
      %p74 = por %p72, %p73
      %p76 = scmp.ne.s32.totalorder %s59, %s75
      %p77 = scmp.eq.s32.totalorder %s25, 0
      %p78 = por %p76, %p77
      %s79 = ssub.s32 %s19, %s26
      %p80 = scmp.eq.s32.totalorder %s79, 0
      %s82 = sadd.s32 %s81, 1
      %s83 = scalar_select %p80, %s81, %s82
      %p86 = pneg %p80
      %p87 = scmp.eq.s32.totalorder %s19, 1
      %p88 = por %p86, %p87
      %p89 = scmp.ne.s32.totalorder %s81, %s84
      %p90 = scmp.eq.s32.totalorder %s19, 0
      %p91 = por %p89, %p90
      %p92 = scmp.ne.s32.totalorder %s81, %s84
      %p93 = scmp.eq.s32.totalorder %s24, 1
      %p94 = por %p92, %p93
      %p95 = scmp.ne.s32.totalorder %s84, %s85
      %p96 = scmp.eq.s32.totalorder %s24, 0
      %p97 = por %p95, %p96
      %p98 = scmp.ne.s32.totalorder %s84, %s85
      %p99 = scmp.eq.s32.totalorder %s25, 1
      %p100 = por %p98, %p99
      %p102 = scmp.ne.s32.totalorder %s85, %s101
      %p103 = scmp.eq.s32.totalorder %s25, 0
      %p104 = por %p102, %p103
      %p105 = scmp.le.s32.totalorder 1, %s19
      %p106 = scmp.lt.s32.totalorder %s19, 3
      %p107 = pnand %p105, %p106
      %p108 = pneg %p107
      // Predicated region
      $region9: #{tpu_custom_call.1} parent=5 // pred_check
        _
      $region10: #{tpu_custom_call.1} parent=5 // pred_check_branch
        %110 = sbr.rel (%p107) target = $region12
      $region11: #{tpu_custom_call.1} parent=5 // pred_region
        %s111 = ssub.s32 %s19, 1
      $region12: #{tpu_custom_call.1} parent=5 // pred_fallthru
        _
      %p112 = scmp.lt.s32.totalorder %s19, 2
      // Predicated region
      $region13: #{tpu_custom_call.1} parent=5 // pred_check
        %p113 = pneg %p112
      $region14: #{tpu_custom_call.1} parent=5 // pred_check_branch
        %115 = sbr.rel (%p113) target = $region16
      $region15: #{tpu_custom_call.1} parent=5 // pred_region
        // Predicated region
        $region17: #{tpu_custom_call.1} parent=15 // pred_check
          %p116 = pneg %p39
        $region18: #{tpu_custom_call.1} parent=15 // pred_check_branch
          %118 = sbr.rel (%p116) target = $region20
        $region19: #{tpu_custom_call.1} parent=15 // pred_region
          %s119 = sand.u32 %s29, 1
          %s120 = scalar_lea.sflag [#allocation5], %s119
          %s121 = sand.u32 %s29, 1
          %s122 = smul.addr %s121, 32
          %s123 = scalar_lea.vmem [#allocation4], %s122
          %s124 = smul.u32 8, %s19
          %s126 = ssub.s32 512, 512
          %127 = vsyncadd %s120, %s126
          %s128 = smul.addr %s124, 64
          %s129 = scalar_lea.hbm %s1, %s128
          %s130 = sshll.u32 %s123, 4
          %s131 = int_to_ptr.vmem [resolvable:$true] %s130
          %136 = dma.hbm_to_vmem [thread:$0]  %s129, 512, %s131, %s120, 64, 64, 4
        $region20: #{tpu_custom_call.1} parent=15 // pred_fallthru
          _
        // Predicated region
        $region21: #{tpu_custom_call.1} parent=15 // pred_check
          %p137 = pneg %p65
        $region22: #{tpu_custom_call.1} parent=15 // pred_check_branch
          %139 = sbr.rel (%p137) target = $region24
        $region23: #{tpu_custom_call.1} parent=15 // pred_region
          %s140 = sand.u32 %s55, 1
          %s141 = scalar_lea.sflag [#allocation8], %s140
          %s142 = sand.u32 %s55, 1
          %s143 = smul.addr %s142, 8
          %s144 = scalar_lea.vmem [#allocation7], %s143
          %s145 = smul.u32 8, %s19
          %s147 = ssub.s32 128, 128
          %148 = vsyncadd %s141, %s147
          %s149 = smul.addr %s145, 16
          %s150 = scalar_lea.hbm %s2, %s149
          %s151 = sshll.u32 %s144, 4
          %s152 = int_to_ptr.vmem [resolvable:$true] %s151
          %157 = dma.hbm_to_vmem [thread:$0]  %s150, 128, %s152, %s141, 16, 16, 1
        $region24: #{tpu_custom_call.1} parent=15 // pred_fallthru
          _
      $region16: #{tpu_custom_call.1} parent=5 // pred_fallthru
        _
      %p158 = scmp.le.s32.totalorder 1, %s19
      %p159 = scmp.lt.s32.totalorder %s19, 3
      %p160 = pnand %p158, %p159
      %p161 = pneg %p160
      // Predicated region
      $region25: #{tpu_custom_call.1} parent=5 // pred_check
        _
      $region26: #{tpu_custom_call.1} parent=5 // pred_check_branch
        %163 = sbr.rel (%p160) target = $region28
      $region27: #{tpu_custom_call.1} parent=5 // pred_region
        %s164 = ssub.s32 %s19, 1
        %s165 = sand.u32 %s32, 1
        %s166 = scalar_lea.sflag [#allocation5], %s165
        %s167 = sand.u32 %s32, 1
        %s168 = smul.addr %s167, 32
        %s169 = scalar_lea.vmem [#allocation4], %s168
        // Predicated region
        $region29: #{tpu_custom_call.1} parent=27 // pred_check
          %p170 = pneg %p45
        $region30: #{tpu_custom_call.1} parent=27 // pred_check_branch
          %172 = sbr.rel (%p170) target = $region32
        $region31: #{tpu_custom_call.1} parent=27 // pred_region
          %173 = dma.done %s166, 512
        $region32: #{tpu_custom_call.1} parent=27 // pred_fallthru
          _
        %s174 = sand.u32 %s58, 1
        %s175 = scalar_lea.sflag [#allocation8], %s174
        %s176 = sand.u32 %s58, 1
        %s177 = smul.addr %s176, 8
        %s178 = scalar_lea.vmem [#allocation7], %s177
        // Predicated region
        $region33: #{tpu_custom_call.1} parent=27 // pred_check
          %p179 = pneg %p71
        $region34: #{tpu_custom_call.1} parent=27 // pred_check_branch
          %181 = sbr.rel (%p179) target = $region36
        $region35: #{tpu_custom_call.1} parent=27 // pred_region
          %182 = dma.done %s175, 128
        $region36: #{tpu_custom_call.1} parent=27 // pred_fallthru
          _
        %s183 = sand.u32 %s32, 1
        %s184 = scalar_lea.sflag [#allocation5], %s183
        %s185 = sand.u32 %s32, 1
        %s186 = smul.addr %s185, 32
        %s187 = scalar_lea.vmem [#allocation4], %s186
        %p188 = pneg %p45
        %p189 = pneg %p42
        %s190 = sand.u32 %s58, 1
        %s191 = scalar_lea.sflag [#allocation8], %s190
        %s192 = sand.u32 %s58, 1
        %s193 = smul.addr %s192, 8
        %s194 = scalar_lea.vmem [#allocation7], %s193
        %p195 = pneg %p71
        %p196 = pneg %p68
        %p197 = pneg %p97
        %p198 = pneg %p94
        %s199 = sand.u32 %s84, 1
        %s200 = scalar_lea.sflag [#allocation6], %s199
        %s201 = sand.u32 %s84, 1
        %s202 = smul.addr %s201, 32
        %s203 = scalar_lea.vmem [#allocation9], %s202
        %s204 = smul.u32 8, %s24
        %s205 = smul.u32 8, %s24
        %s206 = smul.u32 8, %s24
        %v207 = vld [vmem:[%s169] sm:$0xf]
        %v208 = vld [vmem:[%s169 + $0x4] sm:$0xf]
        %v209 = vld [vmem:[%s169 + $0x8] sm:$0xf]
        %v210 = vld [vmem:[%s169 + $0xc] sm:$0xf]
        %v211 = vld [vmem:[%s169 + $0x10] sm:$0xf]
        %v212 = vld [vmem:[%s169 + $0x14] sm:$0xf]
        %v213 = vld [vmem:[%s169 + $0x18] sm:$0xf]
        %v214 = vld [vmem:[%s169 + $0x1c] sm:$0xf]
        %v215 = vld [vmem:[%s178] sm:$0x1]
        %v216 = vld [vmem:[%s178 + $0x1] sm:$0x1]
        %v217 = vld [vmem:[%s178 + $0x2] sm:$0x1]
        %v218 = vld [vmem:[%s178 + $0x3] sm:$0x1]
        %v219 = vld [vmem:[%s178 + $0x4] sm:$0x1]
        %v220 = vld [vmem:[%s178 + $0x5] sm:$0x1]
        %v221 = vld [vmem:[%s178 + $0x6] sm:$0x1]
        %v222 = vld [vmem:[%s178 + $0x7] sm:$0x1]
        %v231 = vlaneseq
        %v232 = vshrl.u32 %v231, 7
        %v233 = vsub.s32 0, %v232
        %v234 = vrot.slane %v215, %v233
        %v235 = vlaneseq
        %v236 = vshrl.u32 %v235, 7
        %v237 = vsub.s32 0, %v236
        %v238 = vrot.slane %v216, %v237
        %v239 = vlaneseq
        %v240 = vshrl.u32 %v239, 7
        %v241 = vsub.s32 0, %v240
        %v242 = vrot.slane %v217, %v241
        %v243 = vlaneseq
        %v244 = vshrl.u32 %v243, 7
        %v245 = vsub.s32 0, %v244
        %v246 = vrot.slane %v218, %v245
        %v247 = vlaneseq
        %v248 = vshrl.u32 %v247, 7
        %v249 = vsub.s32 0, %v248
        %v250 = vrot.slane %v219, %v249
        %v251 = vlaneseq
        %v252 = vshrl.u32 %v251, 7
        %v253 = vsub.s32 0, %v252
        %v254 = vrot.slane %v220, %v253
        %v255 = vlaneseq
        %v256 = vshrl.u32 %v255, 7
        %v257 = vsub.s32 0, %v256
        %v258 = vrot.slane %v221, %v257
        %v259 = vlaneseq
        %v260 = vshrl.u32 %v259, 7
        %v261 = vsub.s32 0, %v260
        %v262 = vrot.slane %v222, %v261
        %v271 = vadd.f32 %v207, %v234
        %v272 = vadd.f32 %v208, %v238
        %v273 = vadd.f32 %v209, %v242
        %v274 = vadd.f32 %v210, %v246
        %v275 = vadd.f32 %v211, %v250
        %v276 = vadd.f32 %v212, %v254
        %v277 = vadd.f32 %v213, %v258
        %v278 = vadd.f32 %v214, %v262
        %279 = vst [vmem:[%s203] sm:$0xf] %v271
        %280 = vst [vmem:[%s203 + $0x4] sm:$0xf] %v272
        %281 = vst [vmem:[%s203 + $0x8] sm:$0xf] %v273
        %282 = vst [vmem:[%s203 + $0xc] sm:$0xf] %v274
        %283 = vst [vmem:[%s203 + $0x10] sm:$0xf] %v275
        %284 = vst [vmem:[%s203 + $0x14] sm:$0xf] %v276
        %285 = vst [vmem:[%s203 + $0x18] sm:$0xf] %v277
        %286 = vst [vmem:[%s203 + $0x1c] sm:$0xf] %v278
        %s287 = sand.u32 %s84, 1
        %s288 = scalar_lea.sflag [#allocation6], %s287
        %s289 = sand.u32 %s84, 1
        %s290 = smul.addr %s289, 32
        %s291 = scalar_lea.vmem [#allocation9], %s290
        // Predicated region
        $region37: #{tpu_custom_call.1} parent=27 // pred_check
          %p292 = pneg %p94
        $region38: #{tpu_custom_call.1} parent=27 // pred_check_branch
          %294 = sbr.rel (%p292) target = $region40
        $region39: #{tpu_custom_call.1} parent=27 // pred_region
          %s295 = smul.u32 8, %s24
          %s297 = ssub.s32 512, 512
          %298 = vsyncadd %s288, %s297
          %s299 = smul.addr %s295, 64
          %s300 = scalar_lea.hbm %s3, %s299
          %s301 = sshll.u32 %s291, 4
          %s302 = int_to_ptr.vmem [resolvable:$true] %s301
          %307 = dma.vmem_to_hbm [thread:$0]  %s302, 512, %s300, %s288, 64, 64, 4
        $region40: #{tpu_custom_call.1} parent=27 // pred_fallthru
          _
      $region28: #{tpu_custom_call.1} parent=5 // pred_fallthru
        _
      %p308 = scmp.le.s32.totalorder 2, %s19
      // Predicated region
      $region41: #{tpu_custom_call.1} parent=5 // pred_check
        %p309 = pneg %p308
      $region42: #{tpu_custom_call.1} parent=5 // pred_check_branch
        %311 = sbr.rel (%p309) target = $region44
      $region43: #{tpu_custom_call.1} parent=5 // pred_region
        %s312 = ssub.s32 %s19, 2
        // Predicated region
        $region45: #{tpu_custom_call.1} parent=43 // pred_check
          %p313 = pneg %p100
        $region46: #{tpu_custom_call.1} parent=43 // pred_check_branch
          %315 = sbr.rel (%p313) target = $region48
        $region47: #{tpu_custom_call.1} parent=43 // pred_region
          %s316 = sand.u32 %s85, 1
          %s317 = scalar_lea.sflag [#allocation6], %s316
          %s318 = sand.u32 %s85, 1
          %s319 = smul.addr %s318, 32
          %s320 = scalar_lea.vmem [#allocation9], %s319
          %321 = dma.done %s317, 512
        $region48: #{tpu_custom_call.1} parent=43 // pred_fallthru
          _
      $region44: #{tpu_custom_call.1} parent=5 // pred_fallthru
        _
    $region6: #{tpu_custom_call.1} parent=1 // loop_footer
      %s23 = sadd.s32 1, %s19
    $region7: #{tpu_custom_call.1} parent=1 // loop_footer_branch
      %18 = sbr.rel target = $region3
    $region8: #{tpu_custom_call.1} parent=1 // loop_exit
      _
    %322 = vsyncpa [#allocation5], 1
    %s323 = scalar_lea.sflag [#allocation5], 1
    %324 = vsyncpa %s323, 1
    %325 = vsyncpa [#allocation8], 1
    %s326 = scalar_lea.sflag [#allocation8], 1
    %327 = vsyncpa %s326, 1
    %328 = vsyncpa [#allocation6], 1
    %s329 = scalar_lea.sflag [#allocation6], 1
    %330 = vsyncpa %s329, 1

</llo_original>
